<compile_context>
chip_gen: v5e
topology: v5e:2x2
jax: 0.10.0
libtpu: 0.0.40
codegen_flags: <defaults>
</compile_context>

<pallas_src>
import jax
import jax.numpy as jnp
from jax.experimental import pallas as pl
from jax.experimental.pallas import tpu as pltpu


def _layernorm_kernel(x_ref, gamma_ref, beta_ref, o_ref, *, eps, n_feat):
    # x_ref: (TB, N) block, N = C*H*W (lane-dense, multiple of 128 here)
    # gamma_ref / beta_ref: (1, N) pre-broadcast affine params
    x = x_ref[...].astype(jnp.float32)
    g = gamma_ref[...].astype(jnp.float32)
    b = beta_ref[...].astype(jnp.float32)

    inv_n = 1.0 / n_feat
    inv_nm1 = 1.0 / max(n_feat - 1, 1)  # guard n_feat == 1

    # Two-pass moments: mean, then sum of squared deviations. Numerically
    # robust; the extra elementwise pass hides under the HBM-bound DMA.
    mean = jnp.sum(x, axis=-1, keepdims=True) * inv_n          # (TB, 1)
    d = x - mean                                               # sublane bcast
    var = jnp.sum(d * d, axis=-1, keepdims=True) * inv_nm1     # unbiased (N-1)
    std = jnp.sqrt(var)

    # PyTorch module divides by (std + eps), NOT sqrt(var + eps).
    # One reciprocal per row; per-element work is a VPU multiply.
    inv = pl.reciprocal(std + eps, approx=False)               # (TB, 1), exact

    y = d * inv                  # straight VPU ops
    y = y * g + b                # per-feature affine, pre-broadcast gamma/beta
    o_ref[...] = y.astype(o_ref.dtype)


def _round_up(v, m):
    return ((v + m - 1) // m) * m


def _sublane_multiple(dtype):
    itemsize = jnp.dtype(dtype).itemsize
    if itemsize >= 4:
        return 8
    if itemsize == 2:
        return 16
    return 32


def layer_norm(x, gamma, beta, eps=1e-5):
    """x: (B, C, H, W); gamma/beta: (C,). Matches the PyTorch module's forward."""
    B, C, H, W = x.shape
    HW = H * W
    N = C * HW

    # Flatten each sample to one lane-dense row.
    x2 = x.reshape(B, N)
    # Pre-broadcast per-channel affine params to the flattened feature layout.
    g = jnp.broadcast_to(gamma.reshape(C, 1), (C, HW)).reshape(1, N).astype(x.dtype)
    b = jnp.broadcast_to(beta.reshape(C, 1), (C, HW)).reshape(1, N).astype(x.dtype)

    # Rows per grid step.  Aim for >= TARGET_STEPS grid steps so the pipeline
    # double-buffers (and v7x's 2 TCs both get work), while keeping TB capped
    # so each block stays >= ~0.5-1 MiB and per-step overhead amortizes.
    sub = _sublane_multiple(x.dtype)
    TARGET_STEPS = 8
    MAX_TB = 512
    if B <= sub:
        TB = B  # full-dim exemption from the (sublane, 128) tile rule
    else:
        TB = max(sub, min(MAX_TB, _round_up(pl.cdiv(B, TARGET_STEPS), sub)))

    # VMEM budget: double-buffered input + output blocks, resident gamma/beta,
    # plus headroom for f32 elementwise temporaries inside the kernel body.
    itemsize = jnp.dtype(x.dtype).itemsize
    block_bytes = TB * N * itemsize
    vmem_need = 4 * block_bytes + 2 * N * itemsize + 6 * TB * N * 4
    vmem_limit = int(min(max(vmem_need, 16 << 20), 32 << 20))

    kernel = lambda xr, gr, br, orf: _layernorm_kernel(
        xr, gr, br, orf, eps=eps, n_feat=N
    )

    out = pl.pallas_call(
        kernel,
        out_shape=jax.ShapeDtypeStruct((B, N), x.dtype),
        grid_spec=pltpu.PrefetchScalarGridSpec(
            num_scalar_prefetch=0,
            grid=(pl.cdiv(B, TB),),
            in_specs=[
                pl.BlockSpec((TB, N), lambda i: (i, 0)),
                pl.BlockSpec((1, N), lambda i: (0, 0)),
                pl.BlockSpec((1, N), lambda i: (0, 0)),
            ],
            out_specs=pl.BlockSpec((TB, N), lambda i: (i, 0)),
        ),
        compiler_params=pltpu.CompilerParams(
            # Batch axis parallel: shards across v7x's 2 TensorCores; no-op on v5e/v6e.
            dimension_semantics=("parallel",),
            vmem_limit_bytes=vmem_limit,
        ),
    )(x2, g, b)

    return out.reshape(B, C, H, W)


def _reference(x, gamma, beta, eps=1e-5):
    # pure-JAX reference matching the PyTorch forward
    B = x.shape[0]
    xf = x.reshape(B, -1).astype(jnp.float32)
    mean = xf.mean(axis=1).reshape(B, 1, 1, 1)
    std = jnp.sqrt(xf.var(axis=1, ddof=1)).reshape(B, 1, 1, 1)
    y = (x.astype(jnp.float32) - mean) / (std + eps)
    y = y * gamma.reshape(1, -1, 1, 1) + beta.reshape(1, -1, 1, 1)
    return y.astype(x.dtype)


if __name__ == "__main__":
    key = jax.random.PRNGKey(0)
    B, C, H, W = 2, 4, 16, 16

    x = jax.random.normal(key, (B, C, H, W), dtype=jnp.float32)
    # deterministic parameter init matching nn.Parameter(ones/zeros)
    gamma = jnp.ones((C,), dtype=jnp.float32)
    beta = jnp.zeros((C,), dtype=jnp.float32)

    out = layer_norm(x, gamma, beta, eps=1e-5)
    out = jax.block_until_ready(out)

    ref = _reference(x, gamma, beta, eps=1e-5)
    assert out.shape == (B, C, H, W)
    assert jnp.allclose(out, ref, atol=1e-4, rtol=1e-4)

    print("KERNEL_OK")
</pallas_src>

<mosaic_0001>
module attributes {stable_mosaic.version = 11 : i64} {
  func.func @_lambda_(%arg0: i32, %arg1: memref<2x1024xf32, #tpu.memory_space<vmem>>, %arg2: memref<1x1024xf32, #tpu.memory_space<vmem>>, %arg3: memref<1x1024xf32, #tpu.memory_space<vmem>>, %arg4: memref<2x1024xf32, #tpu.memory_space<vmem>>) attributes {dimension_semantics = [#tpu.dimension_semantics<parallel>], iteration_bounds = array<i64: 1>, scalar_prefetch = 0 : i64, scratch_operands = 0 : i64, tpu.core_type = #tpu.core_type<tc>, window_params = [{transform_indices = @transform_0, window_bounds = array<i64: 2, 1024>}, {pipeline_mode = #tpu.pipeline_mode<synchronous>, transform_indices = @transform_1, window_bounds = array<i64: 1, 1024>}, {pipeline_mode = #tpu.pipeline_mode<synchronous>, transform_indices = @transform_2, window_bounds = array<i64: 1, 1024>}, {transform_indices = @transform_3, window_bounds = array<i64: 2, 1024>}]} {
    %c0 = arith.constant 0 : index
    %c0_0 = arith.constant 0 : index
    %0 = vector.load %arg1[%c0, %c0_0] : memref<2x1024xf32, #tpu.memory_space<vmem>>, vector<2x1024xf32>
    %c0_1 = arith.constant 0 : index
    %c0_2 = arith.constant 0 : index
    %1 = vector.load %arg2[%c0_1, %c0_2] : memref<1x1024xf32, #tpu.memory_space<vmem>>, vector<1x1024xf32>
    %c0_3 = arith.constant 0 : index
    %c0_4 = arith.constant 0 : index
    %2 = vector.load %arg3[%c0_3, %c0_4] : memref<1x1024xf32, #tpu.memory_space<vmem>>, vector<1x1024xf32>
    %cst = arith.constant dense<0.000000e+00> : vector<2xf32>
    %3 = vector.multi_reduction <add>, %0, %cst [1] : vector<2x1024xf32> to vector<2xf32>
    %4 = vector.shape_cast %3 : vector<2xf32> to vector<2x1xf32>
    %cst_5 = arith.constant 9.765625E-4 : f32
    %5 = vector.broadcast %cst_5 : f32 to vector<2x1xf32>
    %6 = arith.mulf %4, %5 : vector<2x1xf32>
    %7 = vector.broadcast %6 : vector<2x1xf32> to vector<2x1024xf32>
    %8 = arith.subf %0, %7 : vector<2x1024xf32>
    %9 = arith.mulf %8, %8 : vector<2x1024xf32>
    %cst_6 = arith.constant dense<0.000000e+00> : vector<2xf32>
    %10 = vector.multi_reduction <add>, %9, %cst_6 [1] : vector<2x1024xf32> to vector<2xf32>
    %11 = vector.shape_cast %10 : vector<2xf32> to vector<2x1xf32>
    %cst_7 = arith.constant 9.77517105E-4 : f32
    %12 = vector.broadcast %cst_7 : f32 to vector<2x1xf32>
    %13 = arith.mulf %11, %12 : vector<2x1xf32>
    %14 = math.sqrt %13 : vector<2x1xf32>
    %cst_8 = arith.constant 9.99999974E-6 : f32
    %15 = vector.broadcast %cst_8 : f32 to vector<2x1xf32>
    %16 = arith.addf %14, %15 : vector<2x1xf32>
    %17 = tpu.reciprocal %16 : vector<2x1xf32> -> vector<2x1xf32>
    %18 = vector.broadcast %17 : vector<2x1xf32> to vector<2x1024xf32>
    %19 = arith.mulf %8, %18 : vector<2x1024xf32>
    %20 = vector.broadcast %1 : vector<1x1024xf32> to vector<2x1024xf32>
    %21 = arith.mulf %19, %20 : vector<2x1024xf32>
    %22 = vector.broadcast %2 : vector<1x1024xf32> to vector<2x1024xf32>
    %23 = arith.addf %21, %22 : vector<2x1024xf32>
    %c0_9 = arith.constant 0 : index
    %c0_10 = arith.constant 0 : index
    %24 = vector.load %arg4[%c0_9, %c0_10] : memref<2x1024xf32, #tpu.memory_space<vmem>>, vector<2x1024xf32>
    tpu.vector_store %arg4[%c0_9, %c0_10], %23 {strides = array<i32>} : memref<2x1024xf32, #tpu.memory_space<vmem>>, vector<2x1024xf32>,
    return
  }
  func.func @transform_0(%arg0: i32) -> (i32, i32) {
    %c0_i32 = arith.constant 0 : i32
    %c0_i32_0 = arith.constant 0 : i32
    return %arg0, %c0_i32 : i32, i32
  }
  func.func @transform_1(%arg0: i32) -> (i32, i32) {
    %c0_i32 = arith.constant 0 : i32
    %c0_i32_0 = arith.constant 0 : i32
    %c0_i32_1 = arith.constant 0 : i32
    return %c0_i32, %c0_i32_0 : i32, i32
  }
  func.func @transform_2(%arg0: i32) -> (i32, i32) {
    %c0_i32 = arith.constant 0 : i32
    %c0_i32_0 = arith.constant 0 : i32
    %c0_i32_1 = arith.constant 0 : i32
    return %c0_i32, %c0_i32_0 : i32, i32
  }
  func.func @transform_3(%arg0: i32) -> (i32, i32) {
    %c0_i32 = arith.constant 0 : i32
    %c0_i32_0 = arith.constant 0 : i32
    return %arg0, %c0_i32 : i32, i32
  }
}

</mosaic_0001>

<llo_original>
// kernel: tpu_custom_call.1
$region0: #{tpu_custom_call.1}
  #allocation0 [shape = 'u32[]', space=smem, size = 0x4, offset = 0x4, fixed_abs, tag = 'smem constant byte address 0x4 - core index']
  #allocation1 [shape = 'u32[72,128]{1,0:T(1,128)}', space=vmem, size = 0x9000, scoped, tag = 'internal scratch']
  %s0 = inlined_call_operand.hbm [shape: f32[2,1024], index: 0, kind: input, shape index: {}]
  %s1 = inlined_call_operand.hbm [shape: f32[1,1024], index: 1, kind: input, shape index: {}]
  %s2 = inlined_call_operand.hbm [shape: f32[1,1024], index: 2, kind: input, shape index: {}]
  %s3 = inlined_call_operand.hbm [shape: f32[2,1024], index: 3, kind: output, shape index: {}]
  %s4 = sld [smem:[#allocation0]]
  $region34: #{tpu_custom_call.1} parent=0
    _
  %s6 = ssub.s32 1, %s4
  %s7 = scalar_select 0, %s6, %s4
  $region1: #{tpu_custom_call.1} parent=0
    #allocation2 [shape = 'u8[8192]{0}', space=vmem, size = 0x2000, scoped, tag = 'input window, operand 0, single buffered']
    #allocation3 [shape = 's32[1]{0}', space=sflag, size = 0x4, scoped, tag = 'scoped memory for tpu_custom_call.1']
    #allocation4 [shape = 's32[1]{0}', space=sflag, size = 0x4, scoped, tag = 'scoped memory for tpu_custom_call.1']
    #allocation5 [shape = 'u8[4096]{0}', space=vmem, size = 0x1000, scoped, tag = 'input window, operand 1, single buffered']
    #allocation6 [shape = 's32[1]{0}', space=sflag, size = 0x4, scoped, tag = 'scoped memory for tpu_custom_call.1']
    #allocation7 [shape = 'u8[4096]{0}', space=vmem, size = 0x1000, scoped, tag = 'input window, operand 2, single buffered']
    #allocation8 [shape = 'u8[8192]{0}', space=vmem, size = 0x2000, scoped, tag = 'output window, operand 0, single buffered']
    %8 = vsyncpa [#allocation3], 0
    %9 = vsyncpa [#allocation6], 0
    %10 = vsyncpa [#allocation4], 0
    // Predicated region
    $region2: #{tpu_custom_call.1} parent=1 // pred_check
      _
    $region3: #{tpu_custom_call.1} parent=1 // pred_check_branch
      %12 = sbr.rel (0) target = $region5
    $region4: #{tpu_custom_call.1} parent=1 // pred_region
      %14 = vsyncadd [#allocation3], 0
      %s16 = sshll.u32 %s0, 4
      %s17 = int_to_ptr.hbm [resolvable:$true] %s16
      %s18 = sshll.u32 [#allocation2], 4
      %s19 = int_to_ptr.vmem [resolvable:$true] %s18
      %21 = dma.hbm_to_vmem [thread:$0]  %s17, 256, %s19, [#allocation3]
    $region5: #{tpu_custom_call.1} parent=1 // pred_fallthru
      _
    // Predicated region
    $region6: #{tpu_custom_call.1} parent=1 // pred_check
      _
    $region7: #{tpu_custom_call.1} parent=1 // pred_check_branch
      %23 = sbr.rel (0) target = $region9
    $region8: #{tpu_custom_call.1} parent=1 // pred_region
      %25 = vsyncadd [#allocation6], 0
      %s27 = sshll.u32 %s1, 4
      %s28 = int_to_ptr.hbm [resolvable:$true] %s27
      %s29 = sshll.u32 [#allocation5], 4
      %s30 = int_to_ptr.vmem [resolvable:$true] %s29
      %32 = dma.hbm_to_vmem [thread:$0]  %s28, 128, %s30, [#allocation6]
    $region9: #{tpu_custom_call.1} parent=1 // pred_fallthru
      _
    // Predicated region
    $region10: #{tpu_custom_call.1} parent=1 // pred_check
      _
    $region11: #{tpu_custom_call.1} parent=1 // pred_check_branch
      %34 = sbr.rel (0) target = $region13
    $region12: #{tpu_custom_call.1} parent=1 // pred_region
      %36 = vsyncadd [#allocation6], 0
      %s38 = sshll.u32 %s2, 4
      %s39 = int_to_ptr.hbm [resolvable:$true] %s38
      %s40 = sshll.u32 [#allocation7], 4
      %s41 = int_to_ptr.vmem [resolvable:$true] %s40
      %43 = dma.hbm_to_vmem [thread:$0]  %s39, 128, %s41, [#allocation6]
    $region13: #{tpu_custom_call.1} parent=1 // pred_fallthru
      _
    // Predicated region
    $region14: #{tpu_custom_call.1} parent=1 // pred_check
      _
    $region15: #{tpu_custom_call.1} parent=1 // pred_check_branch
      %45 = sbr.rel (0) target = $region17
    $region16: #{tpu_custom_call.1} parent=1 // pred_region
      %47 = dma.done [#allocation3], 256
    $region17: #{tpu_custom_call.1} parent=1 // pred_fallthru
      _
    // Predicated region
    $region18: #{tpu_custom_call.1} parent=1 // pred_check
      _
    $region19: #{tpu_custom_call.1} parent=1 // pred_check_branch
      %49 = sbr.rel (0) target = $region21
    $region20: #{tpu_custom_call.1} parent=1 // pred_region
      %51 = dma.done [#allocation6], 128
    $region21: #{tpu_custom_call.1} parent=1 // pred_fallthru
      _
    // Predicated region
    $region22: #{tpu_custom_call.1} parent=1 // pred_check
      _
    $region23: #{tpu_custom_call.1} parent=1 // pred_check_branch
      %53 = sbr.rel (0) target = $region25
    $region24: #{tpu_custom_call.1} parent=1 // pred_region
      %55 = dma.done [#allocation6], 128
    $region25: #{tpu_custom_call.1} parent=1 // pred_fallthru
      _
    %v56 = vld [vmem:[#allocation2] sm:$0xff]
    %v57 = vld [vmem:[#allocation2 + $0x8] sm:$0xff]
    %v58 = vld [vmem:[#allocation5] sm:$0xff]
    %v59 = vld [vmem:[#allocation7] sm:$0xff]
    %62 = vst [vmem:[#allocation1] ss:$4 sm:$0xff] %v56
    %s63 = scalar_lea.vmem [#allocation1], 32
    %64 = vst [vmem:[%s63] ss:$4 sm:$0xff] %v57
    %v65 = vld.sshfl [vmem:[#allocation1] sm:$0xff pattern:$0x73625140]
    %v66 = vld.sshfl [vmem:[#allocation1 + $0x8] sm:$0xff pattern:$0x73625140]
    %v67 = vld.sshfl [vmem:[#allocation1 + $0x10] sm:$0xff pattern:$0x73625140]
    %v68 = vld.sshfl [vmem:[#allocation1 + $0x18] sm:$0xff pattern:$0x73625140]
    %v69 = vld.sshfl [vmem:[#allocation1 + $0x20] sm:$0xff pattern:$0x73625140]
    %v70 = vld.sshfl [vmem:[#allocation1 + $0x28] sm:$0xff pattern:$0x73625140]
    %v71 = vld.sshfl [vmem:[#allocation1 + $0x30] sm:$0xff pattern:$0x73625140]
    %v72 = vld.sshfl [vmem:[#allocation1 + $0x38] sm:$0xff pattern:$0x73625140]
    %vm81 = vcmask 1041408
    %v82 = vsel %vm81, %v65, 0.0
    %v83 = vsel %vm81, %v66, 0.0
    %v84 = vadd.f32 %v82, %v83
    %v85 = vsel %vm81, %v67, 0.0
    %v86 = vadd.f32 %v84, %v85
    %v87 = vsel %vm81, %v68, 0.0
    %v88 = vadd.f32 %v86, %v87
    %v89 = vsel %vm81, %v69, 0.0
    %v90 = vadd.f32 %v88, %v89
    %v91 = vsel %vm81, %v70, 0.0
    %v92 = vadd.f32 %v90, %v91
    %v93 = vsel %vm81, %v71, 0.0
    %v94 = vadd.f32 %v92, %v93
    %v95 = vsel %vm81, %v72, 0.0
    %v96 = vadd.f32 %v94, %v95
    %97 = vadd.xlane.f32.xlu0 %v96
    %v98 = vpop.xlane.xlu0 %97
    %v99 = vmul.f32 %v98, 0.0009765625
    %v102 = vunpack.c.l.s4 269488144
    %v103 = vunpack.c.0.s8 %v102
    %v104 = vperm.slane %v99, %v103
    %v106 = vsub.f32 %v56, %v104
    %v107 = vsub.f32 %v57, %v104
    %v108 = vmul.f32 %v106, %v106
    %v109 = vmul.f32 %v107, %v107
    %112 = vst [vmem:[#allocation1] ss:$4 sm:$0xff] %v108
    %s113 = scalar_lea.vmem [#allocation1], 32
    %114 = vst [vmem:[%s113] ss:$4 sm:$0xff] %v109
    %v115 = vld.sshfl [vmem:[#allocation1] sm:$0xff pattern:$0x73625140]
    %v116 = vld.sshfl [vmem:[#allocation1 + $0x8] sm:$0xff pattern:$0x73625140]
    %v117 = vld.sshfl [vmem:[#allocation1 + $0x10] sm:$0xff pattern:$0x73625140]
    %v118 = vld.sshfl [vmem:[#allocation1 + $0x18] sm:$0xff pattern:$0x73625140]
    %v119 = vld.sshfl [vmem:[#allocation1 + $0x20] sm:$0xff pattern:$0x73625140]
    %v120 = vld.sshfl [vmem:[#allocation1 + $0x28] sm:$0xff pattern:$0x73625140]
    %v121 = vld.sshfl [vmem:[#allocation1 + $0x30] sm:$0xff pattern:$0x73625140]
    %v122 = vld.sshfl [vmem:[#allocation1 + $0x38] sm:$0xff pattern:$0x73625140]
    %v131 = vsel %vm81, %v115, 0.0
    %v132 = vsel %vm81, %v116, 0.0
    %v133 = vadd.f32 %v131, %v132
    %v134 = vsel %vm81, %v117, 0.0
    %v135 = vadd.f32 %v133, %v134
    %v136 = vsel %vm81, %v118, 0.0
    %v137 = vadd.f32 %v135, %v136
    %v138 = vsel %vm81, %v119, 0.0
    %v139 = vadd.f32 %v137, %v138
    %v140 = vsel %vm81, %v120, 0.0
    %v141 = vadd.f32 %v139, %v140
    %v142 = vsel %vm81, %v121, 0.0
    %v143 = vadd.f32 %v141, %v142
    %v144 = vsel %vm81, %v122, 0.0
    %v145 = vadd.f32 %v143, %v144
    %146 = vadd.xlane.f32.xlu0 %v145
    %v147 = vpop.xlane.xlu0 %146
    %v148 = vmul.f32 %v147, 0.0009775171
    %v149 = vrsqrt.pop %v148
    %v150 = vmul.f32 %v149, %v148
    %v151 = vmul.f32 %v150, %v149
    %v152 = vmul.f32 0.5, %v151
    %v153 = vsub.f32 1.5, %v152
    %v154 = vmul.f32 %v149, %v153
    %v155 = vmul.f32 %v148, %v154
    %vm156 = vcmp.eq.f32.partialorder %v148, inf
    %v157 = vsel %vm156, %v148, %v155
    %vm158 = vcmp.eq.f32.partialorder %v148, 0.0
    %v159 = vand.u32 %v148, 2147483648
    %v160 = vsel %vm158, %v159, %v157
    %v161 = vadd.f32 %v160, 1e-05
    %v162 = vrcp.pop %v161
    %v163 = vmul.f32 %v161, %v162
    %v164 = vsub.f32 1.0, %v163
    %v165 = vmul.f32 %v162, %v164
    %v166 = vadd.f32 %v162, %v165
    %vm167 = vweird.f32 %v161
    %vm168 = vweird.f32 %v162
    %vm169 = vmor %vm167, %vm168
    %v170 = vsel %vm169, %v162, %v166
    %v171 = vand.u32 2147483647, %v161
    %vm172 = vcmp.eq.f32.partialorder %v171, 8.507059e+37
    %v173 = vand.u32 %v161, 2147483648
    %v174 = vor.u32 1.1754944e-38, %v173
    %v175 = vsel %vm172, %v174, %v170
    %v178 = vunpack.c.l.s4 269488144
    %v179 = vunpack.c.0.s8 %v178
    %v180 = vperm.slane %v175, %v179
    %v182 = vmul.f32 %v106, %v180
    %v183 = vmul.f32 %v107, %v180
    %v185 = vperm.slane %v58, 0
    %v186 = vperm.slane %v58, 1
    %v187 = vperm.slane %v58, 2
    %v188 = vperm.slane %v58, 3
    %v189 = vperm.slane %v58, 4
    %v190 = vperm.slane %v58, 5
    %v191 = vperm.slane %v58, 6
    %v192 = vperm.slane %v58, 7
    %v193 = vrot.slane %v186, 6
    %v194 = vrot.slane %v187, 4
    %v195 = vrot.slane %v188, 2
    %v196 = vrot.slane %v190, 6
    %v197 = vrot.slane %v191, 4
    %v198 = vrot.slane %v192, 2
    %v199 = vsel %vm81, %v185, %v193
    %vm200 = vcmask 1045508
    %v201 = vsel %vm200, %v194, %v195
    %vm202 = vcmask 1043456
    %v203 = vsel %vm202, %v199, %v201
    %v204 = vsel %vm81, %v189, %v196
    %v205 = vsel %vm200, %v197, %v198
    %v206 = vsel %vm202, %v204, %v205
    %v209 = vmul.f32 %v182, %v203
    %v210 = vmul.f32 %v183, %v206
    %v212 = vperm.slane %v59, 0
    %v213 = vperm.slane %v59, 1
    %v214 = vperm.slane %v59, 2
    %v215 = vperm.slane %v59, 3
    %v216 = vperm.slane %v59, 4
    %v217 = vperm.slane %v59, 5
    %v218 = vperm.slane %v59, 6
    %v219 = vperm.slane %v59, 7
    %v220 = vrot.slane %v213, 6
    %v221 = vrot.slane %v214, 4
    %v222 = vrot.slane %v215, 2
    %v223 = vrot.slane %v217, 6
    %v224 = vrot.slane %v218, 4
    %v225 = vrot.slane %v219, 2
    %v226 = vsel %vm81, %v212, %v220
    %v227 = vsel %vm200, %v221, %v222
    %v228 = vsel %vm202, %v226, %v227
    %v229 = vsel %vm81, %v216, %v223
    %v230 = vsel %vm200, %v224, %v225
    %v231 = vsel %vm202, %v229, %v230
    %v234 = vadd.f32 %v209, %v228
    %v235 = vadd.f32 %v210, %v231
    %236 = vst [vmem:[#allocation8] sm:$0xff] %v234
    %237 = vst [vmem:[#allocation8 + $0x8] sm:$0xff] %v235
    // Predicated region
    $region26: #{tpu_custom_call.1} parent=1 // pred_check
      _
    $region27: #{tpu_custom_call.1} parent=1 // pred_check_branch
      %239 = sbr.rel (0) target = $region29
    $region28: #{tpu_custom_call.1} parent=1 // pred_region
      %241 = vsyncadd [#allocation4], 0
      %s243 = sshll.u32 [#allocation8], 4
      %s244 = int_to_ptr.vmem [resolvable:$true] %s243
      %s245 = sshll.u32 %s3, 4
      %s246 = int_to_ptr.hbm [resolvable:$true] %s245
      %248 = dma.vmem_to_hbm [thread:$0]  %s244, 256, %s246, [#allocation4]
    $region29: #{tpu_custom_call.1} parent=1 // pred_fallthru
      _
    // Predicated region
    $region30: #{tpu_custom_call.1} parent=1 // pred_check
      _
    $region31: #{tpu_custom_call.1} parent=1 // pred_check_branch
      %250 = sbr.rel (0) target = $region33
    $region32: #{tpu_custom_call.1} parent=1 // pred_region
      %252 = dma.done [#allocation4], 256
    $region33: #{tpu_custom_call.1} parent=1 // pred_fallthru
      _
    %253 = vsyncpa [#allocation3], 1
    %254 = vsyncpa [#allocation6], 1
    %255 = vsyncpa [#allocation4], 1

</llo_original>
